<compile_context>
chip_gen: v7x
topology: tpu7x:2x2x1
jax: 0.10.0
libtpu: 0.0.40
codegen_flags: <defaults>
</compile_context>

<pallas_src>
import jax
import jax.numpy as jnp
from jax.experimental import pallas as pl
from jax.experimental.pallas import tpu as pltpu

LANE = 128


def _round_up(x, m):
    return ((x + m - 1) // m) * m


def _make_kernel(filter_sizes, num_features, seq_len, h, h_pad):
    """Builds the fused forward kernel, closed over static shapes."""
    F = num_features

    def kernel(x_ref, wall_ref, ball_ref, fcw_ref, fcb_ref, out_ref):
        bt = x_ref.shape[0]
        e_pad = x_ref.shape[2]
        c_pad = wall_ref.shape[1]

        # --- one fused MXU matmul for every (filter, tap) pair -------------
        x2d = x_ref[...].reshape(bt * seq_len, e_pad)              # bf16
        y = jnp.dot(x2d, wall_ref[...],
                    preferred_element_type=jnp.float32)            # f32 acc
        y = y.reshape(bt, seq_len, c_pad)

        # --- per-filter: sum tap-shifted slabs, global max-pool ------------
        pooled = []
        col = 0
        for k in filter_sizes:
            l_out = seq_len - k + 1
            acc = y[:, 0:l_out, col:col + F]                       # tap 0
            for j in range(1, k):                                  # static unroll
                acc = acc + y[:, j:j + l_out,
                              col + j * F: col + (j + 1) * F]
            pooled.append(jnp.max(acc, axis=1))                    # [Bt, F]
            col += k * F

        cat = jnp.concatenate(pooled, axis=-1)                     # [Bt, n*F]
        # Bias once per filter, after max-pool, then ReLU (all f32 on VPU).
        cat = jnp.maximum(cat + ball_ref[...], 0.0)
        # TODO(synk): training-mode dropout (p=0.5) omitted; eval-mode dropout is identity.

        # --- lane-dense FC (pad hidden to 128, bf16 MXU, f32 acc) ----------
        if h_pad > h:
            cat = jnp.concatenate(
                [cat, jnp.zeros((bt, h_pad - h), jnp.float32)], axis=-1)
        out = jnp.dot(cat.astype(jnp.bfloat16), fcw_ref[...],
                      preferred_element_type=jnp.float32) + fcb_ref[...]
        out_ref[...] = out.astype(out_ref.dtype)

    return kernel


def prepare_params(params, filter_sizes):
    """One-time fuse / zero-pad / bf16-cast of PyTorch-layout parameters."""
    emb = params["embedding"]                         # [V, E] f32
    V, E = emb.shape
    F = params["conv0_b"].shape[1]
    n = len(filter_sizes)

    e_pad = _round_up(E, LANE)
    c = sum(filter_sizes) * F
    c_pad = _round_up(c, LANE)
    h = n * F
    h_pad = _round_up(h, LANE)
    O = params["fc_w"].shape[1]
    o_pad = _round_up(O, LANE)

    emb_p = jnp.zeros((V, e_pad), jnp.bfloat16)
    emb_p = emb_p.at[:, :E].set(emb.astype(jnp.bfloat16))

    # Fused conv weight: columns [ filter0 tap0..tap(k0-1) | filter1 ... ].
    w_all = jnp.zeros((e_pad, c_pad), jnp.float32)
    col = 0
    for i, k in enumerate(filter_sizes):
        w = params[f"conv{i}_w"]                      # [k, E, F]
        for j in range(k):
            w_all = w_all.at[:E, col + j * F: col + (j + 1) * F].set(w[j])
        col += k * F
    w_all = w_all.astype(jnp.bfloat16)

    b_all = jnp.concatenate(
        [params[f"conv{i}_b"] for i in range(n)], axis=-1)          # [1, n*F] f32

    fc_w = jnp.zeros((h_pad, o_pad), jnp.float32)
    fc_w = fc_w.at[:h, :O].set(params["fc_w"]).astype(jnp.bfloat16)
    fc_b = jnp.zeros((1, o_pad), jnp.float32).at[:, :O].set(params["fc_b"])

    return dict(embedding=emb_p, w_all=w_all, b_all=b_all,
                fc_w=fc_w, fc_b=fc_b)


def sentiment_cnn_forward(txt, fused, filter_sizes, output_dim, tile_b=8):
    """txt: int32 [seq_len, batch].  Returns f32 [batch, output_dim]."""
    seq_len, batch = txt.shape
    if seq_len < max(filter_sizes):
        raise ValueError("seq_len must be >= max(filter_sizes)")

    emb_p = fused["embedding"]                        # [V, E_pad] bf16
    e_pad = emb_p.shape[1]
    c_pad = fused["w_all"].shape[1]
    h = fused["b_all"].shape[1]
    h_pad, o_pad = fused["fc_w"].shape
    num_features = h // len(filter_sizes)

    # Transpose-free embedding gather straight into [B, S, E_pad] bf16.
    # TODO(synk): fuse the gather into the kernel (VMEM-pinned table on
    # v5e/v6e, scalar-prefetch + row-DMA gather on v7x) to skip this HBM pass.
    x = jnp.take(emb_p, txt.T, axis=0)                # [B, S, E_pad] bf16

    tile_b = _round_up(min(tile_b, _round_up(batch, 8)), 8)
    b_pad = _round_up(batch, tile_b)
    if b_pad != batch:
        x = jnp.pad(x, ((0, b_pad - batch), (0, 0), (0, 0)))

    kernel = _make_kernel(tuple(filter_sizes), num_features, seq_len, h, h_pad)

    out = pl.pallas_call(
        kernel,
        out_shape=jax.ShapeDtypeStruct((b_pad, o_pad), jnp.float32),
        grid=(b_pad // tile_b,),
        in_specs=[
            pl.BlockSpec((tile_b, seq_len, e_pad), lambda i: (i, 0, 0)),  # x streams
            pl.BlockSpec((e_pad, c_pad), lambda i: (0, 0)),               # weights resident
            pl.BlockSpec((1, h), lambda i: (0, 0)),
            pl.BlockSpec((h_pad, o_pad), lambda i: (0, 0)),
            pl.BlockSpec((1, o_pad), lambda i: (0, 0)),
        ],
        out_specs=pl.BlockSpec((tile_b, o_pad), lambda i: (i, 0)),
        compiler_params=pltpu.CompilerParams(
            dimension_semantics=("parallel",),
            vmem_limit_bytes=48 * 1024 * 1024,
        ),
    )(x, fused["w_all"], fused["b_all"], fused["fc_w"], fused["fc_b"])

    return out[:batch, :output_dim]


def init_params(key, vocab_dim, embed_dim, num_features, filter_sizes,
                output_dim, pad_idx):
    keys = jax.random.split(key, 2 + 2 * len(filter_sizes) + 2)
    ki = iter(keys)

    emb = jax.random.normal(next(ki), (vocab_dim, embed_dim), jnp.float32) * 0.1
    emb = emb.at[pad_idx].set(0.0)   # nn.Embedding(padding_idx=...) zeroes this row
    params = {"embedding": emb}

    for i, k in enumerate(filter_sizes):
        # PyTorch Conv1d weight is [F, E, k]; store as [k, E, F] for the kernel.
        w = jax.random.normal(next(ki), (k, embed_dim, num_features), jnp.float32) * 0.1
        b = jax.random.normal(next(ki), (1, num_features), jnp.float32) * 0.1
        params[f"conv{i}_w"] = w
        params[f"conv{i}_b"] = b

    in_feat = len(filter_sizes) * num_features
    # PyTorch Linear weight is [O, in_feat]; store transposed [in_feat, O].
    params["fc_w"] = jax.random.normal(next(ki), (in_feat, output_dim), jnp.float32) * 0.1
    params["fc_b"] = jax.random.normal(next(ki), (1, output_dim), jnp.float32) * 0.1
    return params


def reference_forward(txt, params, filter_sizes, mxu_dtype=jnp.float32):
    """Pure-JAX mirror of the PyTorch forward (eval mode).

    mxu_dtype=bfloat16 applies the same MXU-boundary casts as the kernel
    (f32 accumulation), for an apples-to-apples numerical comparison.
    """
    x = jnp.take(params["embedding"], txt.T, axis=0)     # [B, S, E] f32
    x_m = x.astype(mxu_dtype)
    seq_len = x.shape[1]
    feats = []
    for i, k in enumerate(filter_sizes):
        w = params[f"conv{i}_w"].astype(mxu_dtype)       # [k, E, F]
        b = params[f"conv{i}_b"]                         # [1, F]
        l_out = seq_len - k + 1
        acc = jnp.zeros((x.shape[0], l_out, w.shape[2]), jnp.float32)
        for j in range(k):
            acc = acc + jnp.einsum("ble,ef->blf", x_m[:, j:j + l_out, :], w[j],
                                   preferred_element_type=jnp.float32)
        acc = jax.nn.relu(acc + b[0][None, None, :])
        feats.append(jnp.max(acc, axis=1))
    cat = jnp.concatenate(feats, axis=-1)
    return (jnp.dot(cat.astype(mxu_dtype), params["fc_w"].astype(mxu_dtype),
                    preferred_element_type=jnp.float32)
            + params["fc_b"][0][None, :])


if __name__ == "__main__":
    # Small, self-consistent shapes; batch=16 -> two batch tiles of 8
    # exercise the pipelined grid.
    vocab_dim = 50
    embed_dim = 32
    num_features = 8
    filter_sizes = (3, 4, 5)
    output_dim = 2
    pad_idx = 0
    seq_len = 16
    batch = 16

    key = jax.random.PRNGKey(0)
    k_params, k_txt = jax.random.split(key)
    params = init_params(k_params, vocab_dim, embed_dim, num_features,
                         filter_sizes, output_dim, pad_idx)
    fused = prepare_params(params, filter_sizes)

    # txt: [seq_len, batch] int ids (matches PyTorch: embed(txt), permute(1,2,0)).
    txt = jax.random.randint(k_txt, (seq_len, batch), 0, vocab_dim, dtype=jnp.int32)

    out = sentiment_cnn_forward(txt, fused, filter_sizes, output_dim)
    out = jax.block_until_ready(out)
    assert out.shape == (batch, output_dim)

    # Matched-precision reference (bf16 MXU operands, f32 accumulation).
    ref_bf16 = jax.block_until_ready(
        reference_forward(txt, params, filter_sizes, mxu_dtype=jnp.bfloat16))
    assert jnp.allclose(out, ref_bf16, atol=5e-3, rtol=5e-3), (out, ref_bf16)

    # Sanity vs the full-f32 reference (difference is bf16 rounding only).
    ref_f32 = jax.block_until_ready(reference_forward(txt, params, filter_sizes))
    assert jnp.allclose(out, ref_f32, atol=5e-2, rtol=5e-2), (out, ref_f32)

    print("KERNEL_OK")
</pallas_src>

<mosaic_0001>
module attributes {stable_mosaic.version = 11 : i64} {
  func.func @kernel(%arg0: i32, %arg1: memref<8x16x128xbf16, #tpu.memory_space<vmem>>, %arg2: memref<128x128xbf16, #tpu.memory_space<vmem>>, %arg3: memref<1x24xf32, #tpu.memory_space<vmem>>, %arg4: memref<128x128xbf16, #tpu.memory_space<vmem>>, %arg5: memref<1x128xf32, #tpu.memory_space<vmem>>, %arg6: memref<8x128xf32, #tpu.memory_space<vmem>>) attributes {dimension_semantics = [#tpu.dimension_semantics<parallel>], iteration_bounds = array<i64: 2>, scalar_prefetch = 0 : i64, scratch_operands = 0 : i64, tpu.core_type = #tpu.core_type<tc>, window_params = [{transform_indices = @transform_0, window_bounds = array<i64: 8, 16, 128>}, {pipeline_mode = #tpu.pipeline_mode<synchronous>, transform_indices = @transform_1, window_bounds = array<i64: 128, 128>}, {pipeline_mode = #tpu.pipeline_mode<synchronous>, transform_indices = @transform_2, window_bounds = array<i64: 1, 24>}, {pipeline_mode = #tpu.pipeline_mode<synchronous>, transform_indices = @transform_3, window_bounds = array<i64: 128, 128>}, {pipeline_mode = #tpu.pipeline_mode<synchronous>, transform_indices = @transform_4, window_bounds = array<i64: 1, 128>}, {transform_indices = @transform_5, window_bounds = array<i64: 8, 128>}]} {
    %c0 = arith.constant 0 : index
    %c0_0 = arith.constant 0 : index
    %c0_1 = arith.constant 0 : index
    %0 = vector.load %arg1[%c0, %c0_0, %c0_1] : memref<8x16x128xbf16, #tpu.memory_space<vmem>>, vector<8x16x128xbf16>
    %1 = vector.shape_cast %0 : vector<8x16x128xbf16> to vector<128x128xbf16>
    %c0_2 = arith.constant 0 : index
    %c0_3 = arith.constant 0 : index
    %2 = vector.load %arg2[%c0_2, %c0_3] : memref<128x128xbf16, #tpu.memory_space<vmem>>, vector<128x128xbf16>
    %cst = arith.constant dense<0.000000e+00> : vector<128x128xf32>
    %3 = tpu.matmul %1, %2, %cst {dimension_numbers = #tpu.dot_dimension_numbers<[1], [0], [0], [1], [0, 0, 1, 1], [], []>} : vector<128x128xbf16>, vector<128x128xbf16>, vector<128x128xf32> -> vector<128x128xf32>
    %4 = vector.shape_cast %3 : vector<128x128xf32> to vector<8x16x128xf32>
    %5 = vector.extract_strided_slice %4 {offsets = [0, 0, 0], sizes = [8, 14, 8], strides = [1, 1, 1]} : vector<8x16x128xf32> to vector<8x14x8xf32>
    %6 = vector.extract_strided_slice %4 {offsets = [0, 1, 8], sizes = [8, 14, 8], strides = [1, 1, 1]} : vector<8x16x128xf32> to vector<8x14x8xf32>
    %7 = arith.addf %5, %6 : vector<8x14x8xf32>
    %8 = vector.extract_strided_slice %4 {offsets = [0, 2, 16], sizes = [8, 14, 8], strides = [1, 1, 1]} : vector<8x16x128xf32> to vector<8x14x8xf32>
    %9 = arith.addf %7, %8 : vector<8x14x8xf32>
    %cst_4 = arith.constant dense<0xFF800000> : vector<8x8xf32>
    %10 = vector.multi_reduction <maximumf>, %9, %cst_4 [1] : vector<8x14x8xf32> to vector<8x8xf32>
    %11 = vector.extract_strided_slice %4 {offsets = [0, 0, 24], sizes = [8, 13, 8], strides = [1, 1, 1]} : vector<8x16x128xf32> to vector<8x13x8xf32>
    %12 = vector.extract_strided_slice %4 {offsets = [0, 1, 32], sizes = [8, 13, 8], strides = [1, 1, 1]} : vector<8x16x128xf32> to vector<8x13x8xf32>
    %13 = arith.addf %11, %12 : vector<8x13x8xf32>
    %14 = vector.extract_strided_slice %4 {offsets = [0, 2, 40], sizes = [8, 13, 8], strides = [1, 1, 1]} : vector<8x16x128xf32> to vector<8x13x8xf32>
    %15 = arith.addf %13, %14 : vector<8x13x8xf32>
    %16 = vector.extract_strided_slice %4 {offsets = [0, 3, 48], sizes = [8, 13, 8], strides = [1, 1, 1]} : vector<8x16x128xf32> to vector<8x13x8xf32>
    %17 = arith.addf %15, %16 : vector<8x13x8xf32>
    %cst_5 = arith.constant dense<0xFF800000> : vector<8x8xf32>
    %18 = vector.multi_reduction <maximumf>, %17, %cst_5 [1] : vector<8x13x8xf32> to vector<8x8xf32>
    %19 = vector.extract_strided_slice %4 {offsets = [0, 0, 56], sizes = [8, 12, 8], strides = [1, 1, 1]} : vector<8x16x128xf32> to vector<8x12x8xf32>
    %20 = vector.extract_strided_slice %4 {offsets = [0, 1, 64], sizes = [8, 12, 8], strides = [1, 1, 1]} : vector<8x16x128xf32> to vector<8x12x8xf32>
    %21 = arith.addf %19, %20 : vector<8x12x8xf32>
    %22 = vector.extract_strided_slice %4 {offsets = [0, 2, 72], sizes = [8, 12, 8], strides = [1, 1, 1]} : vector<8x16x128xf32> to vector<8x12x8xf32>
    %23 = arith.addf %21, %22 : vector<8x12x8xf32>
    %24 = vector.extract_strided_slice %4 {offsets = [0, 3, 80], sizes = [8, 12, 8], strides = [1, 1, 1]} : vector<8x16x128xf32> to vector<8x12x8xf32>
    %25 = arith.addf %23, %24 : vector<8x12x8xf32>
    %26 = vector.extract_strided_slice %4 {offsets = [0, 4, 88], sizes = [8, 12, 8], strides = [1, 1, 1]} : vector<8x16x128xf32> to vector<8x12x8xf32>
    %27 = arith.addf %25, %26 : vector<8x12x8xf32>
    %cst_6 = arith.constant dense<0xFF800000> : vector<8x8xf32>
    %28 = vector.multi_reduction <maximumf>, %27, %cst_6 [1] : vector<8x12x8xf32> to vector<8x8xf32>
    %29 = tpu.concatenate %10, %18, %28 in 1 : vector<8x8xf32>, vector<8x8xf32>, vector<8x8xf32> -> vector<8x24xf32>
    %c0_7 = arith.constant 0 : index
    %c0_8 = arith.constant 0 : index
    %30 = vector.load %arg3[%c0_7, %c0_8] : memref<1x24xf32, #tpu.memory_space<vmem>>, vector<1x24xf32>
    %31 = vector.broadcast %30 : vector<1x24xf32> to vector<8x24xf32>
    %32 = arith.addf %29, %31 : vector<8x24xf32>
    %cst_9 = arith.constant 0.000000e+00 : f32
    %33 = vector.broadcast %cst_9 : f32 to vector<8x24xf32>
    %34 = arith.maximumf %32, %33 : vector<8x24xf32>
    %cst_10 = arith.constant 0.000000e+00 : f32
    %35 = vector.broadcast %cst_10 : f32 to vector<8x104xf32>
    %36 = tpu.concatenate %34, %35 in 1 : vector<8x24xf32>, vector<8x104xf32> -> vector<8x128xf32>
    %37 = arith.truncf %36 : vector<8x128xf32> to vector<8x128xbf16>
    %c0_11 = arith.constant 0 : index
    %c0_12 = arith.constant 0 : index
    %38 = vector.load %arg4[%c0_11, %c0_12] : memref<128x128xbf16, #tpu.memory_space<vmem>>, vector<128x128xbf16>
    %cst_13 = arith.constant dense<0.000000e+00> : vector<8x128xf32>
    %39 = tpu.matmul %37, %38, %cst_13 {dimension_numbers = #tpu.dot_dimension_numbers<[1], [0], [0], [1], [0, 0, 1, 1], [], []>} : vector<8x128xbf16>, vector<128x128xbf16>, vector<8x128xf32> -> vector<8x128xf32>
    %c0_14 = arith.constant 0 : index
    %c0_15 = arith.constant 0 : index
    %40 = vector.load %arg5[%c0_14, %c0_15] : memref<1x128xf32, #tpu.memory_space<vmem>>, vector<1x128xf32>
    %41 = vector.broadcast %40 : vector<1x128xf32> to vector<8x128xf32>
    %42 = arith.addf %39, %41 : vector<8x128xf32>
    %c0_16 = arith.constant 0 : index
    %c0_17 = arith.constant 0 : index
    %43 = vector.load %arg6[%c0_16, %c0_17] : memref<8x128xf32, #tpu.memory_space<vmem>>, vector<8x128xf32>
    tpu.vector_store %arg6[%c0_16, %c0_17], %42 {strides = array<i32>} : memref<8x128xf32, #tpu.memory_space<vmem>>, vector<8x128xf32>,
    return
  }
  func.func @transform_0(%arg0: i32) -> (i32, i32, i32) {
    %c0_i32 = arith.constant 0 : i32
    %c0_i32_0 = arith.constant 0 : i32
    %c0_i32_1 = arith.constant 0 : i32
    return %arg0, %c0_i32, %c0_i32_0 : i32, i32, i32
  }
  func.func @transform_1(%arg0: i32) -> (i32, i32) {
    %c0_i32 = arith.constant 0 : i32
    %c0_i32_0 = arith.constant 0 : i32
    %c0_i32_1 = arith.constant 0 : i32
    return %c0_i32, %c0_i32_0 : i32, i32
  }
  func.func @transform_2(%arg0: i32) -> (i32, i32) {
    %c0_i32 = arith.constant 0 : i32
    %c0_i32_0 = arith.constant 0 : i32
    %c0_i32_1 = arith.constant 0 : i32
    return %c0_i32, %c0_i32_0 : i32, i32
  }
  func.func @transform_3(%arg0: i32) -> (i32, i32) {
    %c0_i32 = arith.constant 0 : i32
    %c0_i32_0 = arith.constant 0 : i32
    %c0_i32_1 = arith.constant 0 : i32
    return %c0_i32, %c0_i32_0 : i32, i32
  }
  func.func @transform_4(%arg0: i32) -> (i32, i32) {
    %c0_i32 = arith.constant 0 : i32
    %c0_i32_0 = arith.constant 0 : i32
    %c0_i32_1 = arith.constant 0 : i32
    return %c0_i32, %c0_i32_0 : i32, i32
  }
  func.func @transform_5(%arg0: i32) -> (i32, i32) {
    %c0_i32 = arith.constant 0 : i32
    %c0_i32_0 = arith.constant 0 : i32
    return %arg0, %c0_i32 : i32, i32
  }
}

</mosaic_0001>

<llo_original>
// kernel: tpu_custom_call.1
$region0: #{tpu_custom_call.1}
  #allocation0 [shape = 'u32[]', space=smem, size = 0x4, offset = 0x4, fixed_abs, tag = 'smem constant byte address 0x4 - core index']
  #allocation1 [shape = 'u32[144,128]{1,0:T(1,128)}', space=vmem, size = 0x12000, scoped, tag = 'internal scratch']
  %s0 = inlined_call_operand.hbm [shape: bf16[16,16,128], index: 0, kind: input, shape index: {}]
  %s1 = inlined_call_operand.hbm [shape: bf16[128,128], index: 1, kind: input, shape index: {}]
  %s2 = inlined_call_operand.vmem [shape: f32[1,24], index: 2, kind: input, shape index: {}]
  %s3 = inlined_call_operand.hbm [shape: bf16[128,128], index: 3, kind: input, shape index: {}]
  %s4 = inlined_call_operand.vmem [shape: f32[1,128], index: 4, kind: input, shape index: {}]
  %s5 = inlined_call_operand.hbm [shape: f32[16,128], index: 5, kind: output, shape index: {}]
  %s6 = sld [smem:[#allocation0]]
  $region65: #{tpu_custom_call.1} parent=0
    _
  %s8 = ssub.s32 1, %s6
  %s9 = scalar_select 0, %s8, %s6
  $region1: #{tpu_custom_call.1} parent=0
    #allocation2 [shape = 'u8[65536]{0}', space=vmem, size = 0x10000, scoped, tag = 'input window, operand 0']
    #allocation3 [shape = 's32[2]{0}', space=sflag, size = 0x8, scoped, tag = 'scoped memory for tpu_custom_call.1']
    #allocation4 [shape = 's32[2]{0}', space=sflag, size = 0x8, scoped, tag = 'scoped memory for tpu_custom_call.1']
    #allocation5 [shape = 'u8[32768]{0}', space=vmem, size = 0x8000, scoped, tag = 'input window, operand 1, single buffered']
    #allocation6 [shape = 's32[1]{0}', space=sflag, size = 0x4, scoped, tag = 'scoped memory for tpu_custom_call.1']
    #allocation7 [shape = 'u8[32768]{0}', space=vmem, size = 0x8000, scoped, tag = 'input window, operand 3, single buffered']
    #allocation8 [shape = 'u8[8192]{0}', space=vmem, size = 0x2000, scoped, tag = 'output window, operand 0']
    %10 = vsyncpa [#allocation3], 0
    %s11 = scalar_lea.sflag [#allocation3], 1
    %12 = vsyncpa %s11, 0
    %13 = vsyncpa [#allocation6], 0
    %14 = vsyncpa [#allocation4], 0
    %s15 = scalar_lea.sflag [#allocation4], 1
    %16 = vsyncpa %s15, 0
    loop: start=0, step=1, limit=4
    $region2: #{tpu_custom_call.1} parent=1 // loop_pre_header
      _
    $region3: #{tpu_custom_call.1} parent=1 // loop_header
      %s18 = sphi 0, %s22
      %p19 = scmp.ge.s32.totalorder %s18, 4
      %s28 = sphi 0, %s30
      %s31 = sphi 0, %s28
      %s32 = sphi 0, %s31
      %s48 = sphi 0, %s32
      %s52 = sphi 0, %s52
      %s54 = sphi 0, %s52
      %s55 = sphi 0, %s54
      %s69 = sphi 0, %s55
      %s73 = sphi 0, %s73
      %s75 = sphi 0, %s73
      %s76 = sphi 0, %s75
      %s90 = sphi 0, %s76
      %s94 = sphi 0, %s94
      %s96 = sphi 0, %s94
      %s97 = sphi 0, %s96
      %s111 = sphi 0, %s97
      %s115 = sphi 0, %s115
      %s117 = sphi 0, %s115
      %s118 = sphi 0, %s117
      %s132 = sphi 0, %s118
      %s138 = sphi 0, %s140
      %s141 = sphi 0, %s138
      %s142 = sphi 0, %s141
      %s158 = sphi 0, %s142
    $region4: #{tpu_custom_call.1} parent=1 // loop_header_branch
      %21 = sbr.rel (%p19) target = $region8
    $region5: #{tpu_custom_call.1} parent=1 // loop_body
      %s23 = ssub.s32 %s18, 1
      %s24 = ssub.s32 %s18, 2
      %s25 = sadd.s32 %s18, 1
      %s26 = ssub.s32 %s18, %s25
      %p27 = scmp.eq.s32.totalorder %s26, 0
      %s29 = sadd.s32 %s28, 1
      %s30 = scalar_select %p27, %s28, %s29
      %p33 = pneg %p27
      %p34 = scmp.eq.s32.totalorder %s18, 1
      %p35 = por %p33, %p34
      %p36 = scmp.ne.s32.totalorder %s28, %s31
      %p37 = scmp.eq.s32.totalorder %s18, 0
      %p38 = por %p36, %p37
      %p39 = scmp.ne.s32.totalorder %s28, %s31
      %p40 = scmp.eq.s32.totalorder %s23, 1
      %p41 = por %p39, %p40
      %p42 = scmp.ne.s32.totalorder %s31, %s32
      %p43 = scmp.eq.s32.totalorder %s23, 0
      %p44 = por %p42, %p43
      %p45 = scmp.ne.s32.totalorder %s31, %s32
      %p46 = scmp.eq.s32.totalorder %s24, 1
      %p47 = por %p45, %p46
      %p49 = scmp.ne.s32.totalorder %s32, %s48
      %p50 = scmp.eq.s32.totalorder %s24, 0
      %p51 = por %p49, %p50
      %s53 = sadd.s32 %s52, 1
      %p56 = scmp.eq.s32.totalorder %s18, 1
      %p57 = scmp.ne.s32.totalorder %s52, %s54
      %p58 = scmp.eq.s32.totalorder %s18, 0
      %p59 = por %p57, %p58
      %p60 = scmp.ne.s32.totalorder %s52, %s54
      %p61 = scmp.eq.s32.totalorder %s23, 1
      %p62 = por %p60, %p61
      %p63 = scmp.ne.s32.totalorder %s54, %s55
      %p64 = scmp.eq.s32.totalorder %s23, 0
      %p65 = por %p63, %p64
      %p66 = scmp.ne.s32.totalorder %s54, %s55
      %p67 = scmp.eq.s32.totalorder %s24, 1
      %p68 = por %p66, %p67
      %p70 = scmp.ne.s32.totalorder %s55, %s69
      %p71 = scmp.eq.s32.totalorder %s24, 0
      %p72 = por %p70, %p71
      %s74 = sadd.s32 %s73, 1
      %p77 = scmp.eq.s32.totalorder %s18, 1
      %p78 = scmp.ne.s32.totalorder %s73, %s75
      %p79 = scmp.eq.s32.totalorder %s18, 0
      %p80 = por %p78, %p79
      %p81 = scmp.ne.s32.totalorder %s73, %s75
      %p82 = scmp.eq.s32.totalorder %s23, 1
      %p83 = por %p81, %p82
      %p84 = scmp.ne.s32.totalorder %s75, %s76
      %p85 = scmp.eq.s32.totalorder %s23, 0
      %p86 = por %p84, %p85
      %p87 = scmp.ne.s32.totalorder %s75, %s76
      %p88 = scmp.eq.s32.totalorder %s24, 1
      %p89 = por %p87, %p88
      %p91 = scmp.ne.s32.totalorder %s76, %s90
      %p92 = scmp.eq.s32.totalorder %s24, 0
      %p93 = por %p91, %p92
      %s95 = sadd.s32 %s94, 1
      %p98 = scmp.eq.s32.totalorder %s18, 1
      %p99 = scmp.ne.s32.totalorder %s94, %s96
      %p100 = scmp.eq.s32.totalorder %s18, 0
      %p101 = por %p99, %p100
      %p102 = scmp.ne.s32.totalorder %s94, %s96
      %p103 = scmp.eq.s32.totalorder %s23, 1
      %p104 = por %p102, %p103
      %p105 = scmp.ne.s32.totalorder %s96, %s97
      %p106 = scmp.eq.s32.totalorder %s23, 0
      %p107 = por %p105, %p106
      %p108 = scmp.ne.s32.totalorder %s96, %s97
      %p109 = scmp.eq.s32.totalorder %s24, 1
      %p110 = por %p108, %p109
      %p112 = scmp.ne.s32.totalorder %s97, %s111
      %p113 = scmp.eq.s32.totalorder %s24, 0
      %p114 = por %p112, %p113
      %s116 = sadd.s32 %s115, 1
      %p119 = scmp.eq.s32.totalorder %s18, 1
      %p120 = scmp.ne.s32.totalorder %s115, %s117
      %p121 = scmp.eq.s32.totalorder %s18, 0
      %p122 = por %p120, %p121
      %p123 = scmp.ne.s32.totalorder %s115, %s117
      %p124 = scmp.eq.s32.totalorder %s23, 1
      %p125 = por %p123, %p124
      %p126 = scmp.ne.s32.totalorder %s117, %s118
      %p127 = scmp.eq.s32.totalorder %s23, 0
      %p128 = por %p126, %p127
      %p129 = scmp.ne.s32.totalorder %s117, %s118
      %p130 = scmp.eq.s32.totalorder %s24, 1
      %p131 = por %p129, %p130
      %p133 = scmp.ne.s32.totalorder %s118, %s132
      %p134 = scmp.eq.s32.totalorder %s24, 0
      %p135 = por %p133, %p134
      %s136 = ssub.s32 %s18, %s25
      %p137 = scmp.eq.s32.totalorder %s136, 0
      %s139 = sadd.s32 %s138, 1
      %s140 = scalar_select %p137, %s138, %s139
      %p143 = pneg %p137
      %p144 = scmp.eq.s32.totalorder %s18, 1
      %p145 = por %p143, %p144
      %p146 = scmp.ne.s32.totalorder %s138, %s141
      %p147 = scmp.eq.s32.totalorder %s18, 0
      %p148 = por %p146, %p147
      %p149 = scmp.ne.s32.totalorder %s138, %s141
      %p150 = scmp.eq.s32.totalorder %s23, 1
      %p151 = por %p149, %p150
      %p152 = scmp.ne.s32.totalorder %s141, %s142
      %p153 = scmp.eq.s32.totalorder %s23, 0
      %p154 = por %p152, %p153
      %p155 = scmp.ne.s32.totalorder %s141, %s142
      %p156 = scmp.eq.s32.totalorder %s24, 1
      %p157 = por %p155, %p156
      %p159 = scmp.ne.s32.totalorder %s142, %s158
      %p160 = scmp.eq.s32.totalorder %s24, 0
      %p161 = por %p159, %p160
      %p162 = scmp.le.s32.totalorder 1, %s18
      %p163 = scmp.lt.s32.totalorder %s18, 3
      %p164 = pnand %p162, %p163
      %p165 = pneg %p164
      // Predicated region
      $region9: #{tpu_custom_call.1} parent=5 // pred_check
        _
      $region10: #{tpu_custom_call.1} parent=5 // pred_check_branch
        %167 = sbr.rel (%p164) target = $region12
      $region11: #{tpu_custom_call.1} parent=5 // pred_region
        %s168 = ssub.s32 %s18, 1
        // Predicated region
        $region13: #{tpu_custom_call.1} parent=11 // pred_check
          %p169 = pneg %p65
        $region14: #{tpu_custom_call.1} parent=11 // pred_check_branch
          %171 = sbr.rel (%p169) target = $region16
        $region15: #{tpu_custom_call.1} parent=11 // pred_region
          %s173 = ssub.s32 1024, 1024
          %174 = vsyncadd [#allocation6], %s173
          %s175 = sshll.u32 [#allocation5], 4
          %s176 = int_to_ptr.vmem [resolvable:$true] %s175
          %181 = dma.hbm_to_vmem [thread:$0]  %s1, 1024, %s176, [#allocation6], 64, 64, 4
        $region16: #{tpu_custom_call.1} parent=11 // pred_fallthru
          _
        // Predicated region
        $region17: #{tpu_custom_call.1} parent=11 // pred_check
          %p182 = pneg %p86
        $region18: #{tpu_custom_call.1} parent=11 // pred_check_branch
          %184 = sbr.rel (%p182) target = $region20
        $region19: #{tpu_custom_call.1} parent=11 // pred_region
          _
        $region20: #{tpu_custom_call.1} parent=11 // pred_fallthru
          _
        // Predicated region
        $region21: #{tpu_custom_call.1} parent=11 // pred_check
          %p185 = pneg %p107
        $region22: #{tpu_custom_call.1} parent=11 // pred_check_branch
          %187 = sbr.rel (%p185) target = $region24
        $region23: #{tpu_custom_call.1} parent=11 // pred_region
          %s189 = ssub.s32 1024, 1024
          %190 = vsyncadd [#allocation6], %s189
          %s191 = sshll.u32 [#allocation7], 4
          %s192 = int_to_ptr.vmem [resolvable:$true] %s191
          %197 = dma.hbm_to_vmem [thread:$0]  %s3, 1024, %s192, [#allocation6], 64, 64, 4
        $region24: #{tpu_custom_call.1} parent=11 // pred_fallthru
          _
        // Predicated region
        $region25: #{tpu_custom_call.1} parent=11 // pred_check
          %p198 = pneg %p128
        $region26: #{tpu_custom_call.1} parent=11 // pred_check_branch
          %200 = sbr.rel (%p198) target = $region28
        $region27: #{tpu_custom_call.1} parent=11 // pred_region
          _
        $region28: #{tpu_custom_call.1} parent=11 // pred_fallthru
          _
      $region12: #{tpu_custom_call.1} parent=5 // pred_fallthru
        _
      %p201 = scmp.lt.s32.totalorder %s18, 2
      // Predicated region
      $region29: #{tpu_custom_call.1} parent=5 // pred_check
        %p202 = pneg %p201
      $region30: #{tpu_custom_call.1} parent=5 // pred_check_branch
        %204 = sbr.rel (%p202) target = $region32
      $region31: #{tpu_custom_call.1} parent=5 // pred_region
        // Predicated region
        $region33: #{tpu_custom_call.1} parent=31 // pred_check
          %p205 = pneg %p38
        $region34: #{tpu_custom_call.1} parent=31 // pred_check_branch
          %207 = sbr.rel (%p205) target = $region36
        $region35: #{tpu_custom_call.1} parent=31 // pred_region
          %s208 = sand.u32 %s28, 1
          %s209 = scalar_lea.sflag [#allocation3], %s208
          %s210 = sand.u32 %s28, 1
          %s211 = smul.addr %s210, 64
          %s212 = scalar_lea.vmem [#allocation2], %s211
          %s213 = smul.u32 8, %s18
          %s215 = ssub.s32 1024, 1024
          %216 = vsyncadd %s209, %s215
          %s217 = smul.addr %s213, 2
          %s218 = smul.addr %s217, 64
          %s219 = scalar_lea.hbm %s0, %s218
          %s220 = sshll.u32 %s212, 4
          %s221 = int_to_ptr.vmem [resolvable:$true] %s220
          %226 = dma.hbm_to_vmem [thread:$0]  %s219, 1024, %s221, %s209, 64, 64, 4
        $region36: #{tpu_custom_call.1} parent=31 // pred_fallthru
          _
      $region32: #{tpu_custom_call.1} parent=5 // pred_fallthru
        _
      %p227 = scmp.le.s32.totalorder 1, %s18
      %p228 = scmp.lt.s32.totalorder %s18, 3
      %p229 = pnand %p227, %p228
      %p230 = pneg %p229
      // Predicated region
      $region37: #{tpu_custom_call.1} parent=5 // pred_check
        _
      $region38: #{tpu_custom_call.1} parent=5 // pred_check_branch
        %232 = sbr.rel (%p229) target = $region40
      $region39: #{tpu_custom_call.1} parent=5 // pred_region
        %s233 = ssub.s32 %s18, 1
        %s234 = sand.u32 %s31, 1
        %s235 = scalar_lea.sflag [#allocation3], %s234
        %s236 = sand.u32 %s31, 1
        %s237 = smul.addr %s236, 64
        %s238 = scalar_lea.vmem [#allocation2], %s237
        // Predicated region
        $region41: #{tpu_custom_call.1} parent=39 // pred_check
          %p239 = pneg %p44
        $region42: #{tpu_custom_call.1} parent=39 // pred_check_branch
          %241 = sbr.rel (%p239) target = $region44
        $region43: #{tpu_custom_call.1} parent=39 // pred_region
          %242 = dma.done %s235, 1024
        $region44: #{tpu_custom_call.1} parent=39 // pred_fallthru
          _
        // Predicated region
        $region45: #{tpu_custom_call.1} parent=39 // pred_check
          %p243 = pneg %p65
        $region46: #{tpu_custom_call.1} parent=39 // pred_check_branch
          %245 = sbr.rel (%p243) target = $region48
        $region47: #{tpu_custom_call.1} parent=39 // pred_region
          %246 = dma.done [#allocation6], 1024
        $region48: #{tpu_custom_call.1} parent=39 // pred_fallthru
          _
        // Predicated region
        $region49: #{tpu_custom_call.1} parent=39 // pred_check
          %p247 = pneg %p107
        $region50: #{tpu_custom_call.1} parent=39 // pred_check_branch
          %249 = sbr.rel (%p247) target = $region52
        $region51: #{tpu_custom_call.1} parent=39 // pred_region
          %250 = dma.done [#allocation6], 1024
        $region52: #{tpu_custom_call.1} parent=39 // pred_fallthru
          _
        %s251 = sand.u32 %s31, 1
        %s252 = scalar_lea.sflag [#allocation3], %s251
        %s253 = sand.u32 %s31, 1
        %s254 = smul.addr %s253, 64
        %s255 = scalar_lea.vmem [#allocation2], %s254
        %p256 = pneg %p44
        %p257 = pneg %p41
        %p258 = pneg %p65
        %p259 = pneg %p62
        %p260 = pneg %p86
        %p261 = pneg %p83
        %p262 = pneg %p107
        %p263 = pneg %p104
        %p264 = pneg %p128
        %p265 = pneg %p125
        %p266 = pneg %p154
        %p267 = pneg %p151
        %s268 = sand.u32 %s141, 1
        %s269 = scalar_lea.sflag [#allocation4], %s268
        %s270 = sand.u32 %s141, 1
        %s271 = smul.addr %s270, 8
        %s272 = scalar_lea.vmem [#allocation8], %s271
        %s273 = smul.u32 8, %s23
        %v275 = vld [vmem:[%s238] sm:$0xf]
        %v276 = vld [vmem:[%s238 + $0x4] sm:$0xf]
        %v277 = vld [vmem:[%s238 + $0x8] sm:$0xf]
        %v278 = vld [vmem:[%s238 + $0xc] sm:$0xf]
        %v279 = vld [vmem:[%s238 + $0x10] sm:$0xf]
        %v280 = vld [vmem:[%s238 + $0x14] sm:$0xf]
        %v281 = vld [vmem:[%s238 + $0x18] sm:$0xf]
        %v282 = vld [vmem:[%s238 + $0x1c] sm:$0xf]
        %v283 = vld [vmem:[%s238 + $0x20] sm:$0xf]
        %v284 = vld [vmem:[%s238 + $0x24] sm:$0xf]
        %v285 = vld [vmem:[%s238 + $0x28] sm:$0xf]
        %v286 = vld [vmem:[%s238 + $0x2c] sm:$0xf]
        %v287 = vld [vmem:[%s238 + $0x30] sm:$0xf]
        %v288 = vld [vmem:[%s238 + $0x34] sm:$0xf]
        %v289 = vld [vmem:[%s238 + $0x38] sm:$0xf]
        %v290 = vld [vmem:[%s238 + $0x3c] sm:$0xf]
        %v291 = vld [vmem:[#allocation5] sm:$0xf]
        %v292 = vld [vmem:[#allocation5 + $0x4] sm:$0xf]
        %v293 = vld [vmem:[#allocation5 + $0x8] sm:$0xf]
        %v294 = vld [vmem:[#allocation5 + $0xc] sm:$0xf]
        %v295 = vld [vmem:[#allocation5 + $0x10] sm:$0xf]
        %v296 = vld [vmem:[#allocation5 + $0x14] sm:$0xf]
        %v297 = vld [vmem:[#allocation5 + $0x18] sm:$0xf]
        %v298 = vld [vmem:[#allocation5 + $0x1c] sm:$0xf]
        %v299 = vld [vmem:[#allocation5 + $0x20] sm:$0xf]
        %v300 = vld [vmem:[#allocation5 + $0x24] sm:$0xf]
        %v301 = vld [vmem:[#allocation5 + $0x28] sm:$0xf]
        %v302 = vld [vmem:[#allocation5 + $0x2c] sm:$0xf]
        %v303 = vld [vmem:[#allocation5 + $0x30] sm:$0xf]
        %v304 = vld [vmem:[#allocation5 + $0x34] sm:$0xf]
        %v305 = vld [vmem:[#allocation5 + $0x38] sm:$0xf]
        %v306 = vld [vmem:[#allocation5 + $0x3c] sm:$0xf]
        %v323 = vunpack.c.l.b16 %v275
        %v324 = vunpack.c.l.b16 %v276
        %v325 = vunpack.c.l.b16 %v277
        %v326 = vunpack.c.l.b16 %v278
        %v327 = vunpack.c.l.b16 %v279
        %v328 = vunpack.c.l.b16 %v280
        %v329 = vunpack.c.l.b16 %v281
        %v330 = vunpack.c.l.b16 %v282
        %v331 = vunpack.c.l.b16 %v283
        %v332 = vunpack.c.l.b16 %v284
        %v333 = vunpack.c.l.b16 %v285
        %v334 = vunpack.c.l.b16 %v286
        %v335 = vunpack.c.l.b16 %v287
        %v336 = vunpack.c.l.b16 %v288
        %v337 = vunpack.c.l.b16 %v289
        %v338 = vunpack.c.l.b16 %v290
        %v339 = vpack.c.b16 %v324, %v323
        %v340 = vpack.c.b16 %v326, %v325
        %v341 = vpack.c.b16 %v328, %v327
        %v342 = vpack.c.b16 %v330, %v329
        %v343 = vpack.c.b16 %v332, %v331
        %v344 = vpack.c.b16 %v334, %v333
        %v345 = vpack.c.b16 %v336, %v335
        %v346 = vpack.c.b16 %v338, %v337
        %v371 = vunpack.c.l.b16 %v291
        %v372 = vunpack.c.l.b16 %v292
        %v373 = vunpack.c.l.b16 %v293
        %v374 = vunpack.c.l.b16 %v294
        %v375 = vunpack.c.l.b16 %v295
        %v376 = vunpack.c.l.b16 %v296
        %v377 = vunpack.c.l.b16 %v297
        %v378 = vunpack.c.l.b16 %v298
        %v379 = vunpack.c.l.b16 %v299
        %v380 = vunpack.c.l.b16 %v300
        %v381 = vunpack.c.l.b16 %v301
        %v382 = vunpack.c.l.b16 %v302
        %v383 = vunpack.c.l.b16 %v303
        %v384 = vunpack.c.l.b16 %v304
        %v385 = vunpack.c.l.b16 %v305
        %v386 = vunpack.c.l.b16 %v306
        %v387 = vpack.c.b16 %v372, %v371
        %v388 = vpack.c.b16 %v374, %v373
        %v389 = vpack.c.b16 %v376, %v375
        %v390 = vpack.c.b16 %v378, %v377
        %v391 = vpack.c.b16 %v380, %v379
        %v392 = vpack.c.b16 %v382, %v381
        %v393 = vpack.c.b16 %v384, %v383
        %v394 = vpack.c.b16 %v386, %v385
        %403 = vmatprep.subr.bf16.mxu0 0
        %404 = vmatpush1.bf16.msra.mxu0 %v387
        %405 = vmatprep.subr.bf16.mxu0 0
        %406 = vmatpush1.bf16.msra.mxu0 %v388
        %407 = vmatprep.subr.bf16.mxu0 0
        %408 = vmatpush1.bf16.msra.mxu0 %v389
        %409 = vmatprep.subr.bf16.mxu0 0
        %410 = vmatpush1.bf16.msra.mxu0 %v390
        %411 = vmatprep.subr.bf16.mxu0 0
        %412 = vmatpush1.bf16.msra.mxu0 %v391
        %413 = vmatprep.subr.bf16.mxu0 0
        %414 = vmatpush1.bf16.msra.mxu0 %v392
        %415 = vmatprep.subr.bf16.mxu0 0
        %416 = vmatpush1.bf16.msra.mxu0 %v393
        %417 = vmatprep.subr.bf16.mxu0 0
        %418 = vmatpush1.bf16.msra.mxu0 %v394
        %419 = vmatprep.subr.bf16.mxu0 0
        %420 = vmatpush1.bf16.msra.mxu0 0
        %421 = vmatprep.subr.bf16.mxu0 0
        %422 = vmatpush1.bf16.msra.mxu0 0
        %423 = vmatprep.subr.bf16.mxu0 0
        %424 = vmatpush1.bf16.msra.mxu0 0
        %425 = vmatprep.subr.bf16.mxu0 0
        %426 = vmatpush1.bf16.msra.mxu0 0
        %427 = vmatprep.subr.bf16.mxu0 0
        %428 = vmatpush1.bf16.msra.mxu0 0
        %429 = vmatprep.subr.bf16.mxu0 0
        %430 = vmatpush1.bf16.msra.mxu0 0
        %431 = vmatprep.subr.bf16.mxu0 0
        %432 = vmatpush1.bf16.msra.mxu0 0
        %433 = vmatprep.subr.bf16.mxu0 0
        %434 = vmatpush1.bf16.msra.mxu0 0
        %435 = vmatprep.mubr.bf16.mxu0 0
        %436 = vmatmul.mubr.bf16.gmra.mrb[0].mxu0 %v339
        %v437 = vpop.f32.mrb[0].mxu0
        %v438 = vadd.f32 0.0, %v437
        %v439 = vpop.f32.mrb[0].mxu0
        %v440 = vpop.f32.mrb[0].mxu0
        %v441 = vadd.f32 0.0, %v440
        %v442 = vpop.f32.mrb[0].mxu0
        %443 = vmatprep.mubr.bf16.mxu0 0
        %444 = vmatmul.mubr.bf16.gmra.mrb[0].mxu0 %v340
        %v445 = vpop.f32.mrb[0].mxu0
        %v446 = vadd.f32 0.0, %v445
        %v447 = vpop.f32.mrb[0].mxu0
        %v448 = vpop.f32.mrb[0].mxu0
        %v449 = vadd.f32 0.0, %v448
        %v450 = vpop.f32.mrb[0].mxu0
        %451 = vmatprep.mubr.bf16.mxu0 0
        %452 = vmatmul.mubr.bf16.gmra.mrb[0].mxu0 %v341
        %v453 = vpop.f32.mrb[0].mxu0
        %v454 = vadd.f32 0.0, %v453
        %v455 = vpop.f32.mrb[0].mxu0
        %v456 = vpop.f32.mrb[0].mxu0
        %v457 = vadd.f32 0.0, %v456
        %v458 = vpop.f32.mrb[0].mxu0
        %459 = vmatprep.mubr.bf16.mxu0 0
        %460 = vmatmul.mubr.bf16.gmra.mrb[0].mxu0 %v342
        %v461 = vpop.f32.mrb[0].mxu0
        %v462 = vadd.f32 0.0, %v461
        %v463 = vpop.f32.mrb[0].mxu0
        %v464 = vpop.f32.mrb[0].mxu0
        %v465 = vadd.f32 0.0, %v464
        %v466 = vpop.f32.mrb[0].mxu0
        %467 = vmatprep.mubr.bf16.mxu0 0
        %468 = vmatmul.mubr.bf16.gmra.mrb[0].mxu0 %v343
        %v469 = vpop.f32.mrb[0].mxu0
        %v470 = vadd.f32 0.0, %v469
        %v471 = vpop.f32.mrb[0].mxu0
        %v472 = vpop.f32.mrb[0].mxu0
        %v473 = vadd.f32 0.0, %v472
        %v474 = vpop.f32.mrb[0].mxu0
        %475 = vmatprep.mubr.bf16.mxu0 0
        %476 = vmatmul.mubr.bf16.gmra.mrb[0].mxu0 %v344
        %v477 = vpop.f32.mrb[0].mxu0
        %v478 = vadd.f32 0.0, %v477
        %v479 = vpop.f32.mrb[0].mxu0
        %v480 = vpop.f32.mrb[0].mxu0
        %v481 = vadd.f32 0.0, %v480
        %v482 = vpop.f32.mrb[0].mxu0
        %483 = vmatprep.mubr.bf16.mxu0 0
        %484 = vmatmul.mubr.bf16.gmra.mrb[0].mxu0 %v345
        %v485 = vpop.f32.mrb[0].mxu0
        %v486 = vadd.f32 0.0, %v485
        %v487 = vpop.f32.mrb[0].mxu0
        %v488 = vpop.f32.mrb[0].mxu0
        %v489 = vadd.f32 0.0, %v488
        %v490 = vpop.f32.mrb[0].mxu0
        %491 = vmatprep.mubr.bf16.mxu0 0
        %492 = vmatmul.mubr.bf16.gmra.mrb[0].mxu0 %v346
        %v493 = vpop.f32.mrb[0].mxu0
        %v494 = vadd.f32 0.0, %v493
        %v495 = vpop.f32.mrb[0].mxu0
        %v496 = vpop.f32.mrb[0].mxu0
        %v497 = vadd.f32 0.0, %v496
        %v498 = vpop.f32.mrb[0].mxu0
        %499 = vdwg.mxu0
        %vm516 = vcmask 1046528
        %v517 = vrot.slane %v438, 1
        %v518 = vrot.slane %v441, 1
        %v519 = vsel %vm516, %v517, %v518
        %v520 = vrot.slane %v446, 1
        %v521 = vrot.slane %v449, 1
        %v522 = vsel %vm516, %v520, %v521
        %v523 = vrot.slane %v454, 1
        %v524 = vrot.slane %v457, 1
        %v525 = vsel %vm516, %v523, %v524
        %v526 = vrot.slane %v462, 1
        %v527 = vrot.slane %v465, 1
        %v528 = vsel %vm516, %v526, %v527
        %v529 = vrot.slane %v470, 1
        %v530 = vrot.slane %v473, 1
        %v531 = vsel %vm516, %v529, %v530
        %v532 = vrot.slane %v478, 1
        %v533 = vrot.slane %v481, 1
        %v534 = vsel %vm516, %v532, %v533
        %v535 = vrot.slane %v486, 1
        %v536 = vrot.slane %v489, 1
        %v537 = vsel %vm516, %v535, %v536
        %v538 = vrot.slane %v494, 1
        %v539 = vrot.slane %v497, 1
        %v540 = vsel %vm516, %v538, %v539
        %541 = vrot.lane.b32.xlu0 %v519, 120
        %v542 = vpop.permute.xlu0 %541
        %543 = vrot.lane.b32.xlu0 %v518, 120
        %v544 = vpop.permute.xlu0 %543
        %545 = vrot.lane.b32.xlu0 %v522, 120
        %v546 = vpop.permute.xlu0 %545
        %547 = vrot.lane.b32.xlu0 %v521, 120
        %v548 = vpop.permute.xlu0 %547
        %549 = vrot.lane.b32.xlu0 %v525, 120
        %v550 = vpop.permute.xlu0 %549
        %551 = vrot.lane.b32.xlu0 %v524, 120
        %v552 = vpop.permute.xlu0 %551
        %553 = vrot.lane.b32.xlu0 %v528, 120
        %v554 = vpop.permute.xlu0 %553
        %555 = vrot.lane.b32.xlu0 %v527, 120
        %v556 = vpop.permute.xlu0 %555
        %557 = vrot.lane.b32.xlu0 %v531, 120
        %v558 = vpop.permute.xlu0 %557
        %559 = vrot.lane.b32.xlu0 %v530, 120
        %v560 = vpop.permute.xlu0 %559
        %561 = vrot.lane.b32.xlu0 %v534, 120
        %v562 = vpop.permute.xlu0 %561
        %563 = vrot.lane.b32.xlu0 %v533, 120
        %v564 = vpop.permute.xlu0 %563
        %565 = vrot.lane.b32.xlu0 %v537, 120
        %v566 = vpop.permute.xlu0 %565
        %567 = vrot.lane.b32.xlu0 %v536, 120
        %v568 = vpop.permute.xlu0 %567
        %569 = vrot.lane.b32.xlu0 %v540, 120
        %v570 = vpop.permute.xlu0 %569
        %571 = vrot.lane.b32.xlu0 %v539, 120
        %v572 = vpop.permute.xlu0 %571
        %v589 = vadd.f32 %v438, %v542
        %v590 = vadd.f32 %v441, %v544
        %v591 = vadd.f32 %v446, %v546
        %v592 = vadd.f32 %v449, %v548
        %v593 = vadd.f32 %v454, %v550
        %v594 = vadd.f32 %v457, %v552
        %v595 = vadd.f32 %v462, %v554
        %v596 = vadd.f32 %v465, %v556
        %v597 = vadd.f32 %v470, %v558
        %v598 = vadd.f32 %v473, %v560
        %v599 = vadd.f32 %v478, %v562
        %v600 = vadd.f32 %v481, %v564
        %v601 = vadd.f32 %v486, %v566
        %v602 = vadd.f32 %v489, %v568
        %v603 = vadd.f32 %v494, %v570
        %v604 = vadd.f32 %v497, %v572
        %vm605 = vcmask 1045504
        %v606 = vrot.slane %v438, 2
        %v607 = vrot.slane %v441, 2
        %v608 = vsel %vm605, %v606, %v607
        %v609 = vrot.slane %v446, 2
        %v610 = vrot.slane %v449, 2
        %v611 = vsel %vm605, %v609, %v610
        %v612 = vrot.slane %v454, 2
        %v613 = vrot.slane %v457, 2
        %v614 = vsel %vm605, %v612, %v613
        %v615 = vrot.slane %v462, 2
        %v616 = vrot.slane %v465, 2
        %v617 = vsel %vm605, %v615, %v616
        %v618 = vrot.slane %v470, 2
        %v619 = vrot.slane %v473, 2
        %v620 = vsel %vm605, %v618, %v619
        %v621 = vrot.slane %v478, 2
        %v622 = vrot.slane %v481, 2
        %v623 = vsel %vm605, %v621, %v622
        %v624 = vrot.slane %v486, 2
        %v625 = vrot.slane %v489, 2
        %v626 = vsel %vm605, %v624, %v625
        %v627 = vrot.slane %v494, 2
        %v628 = vrot.slane %v497, 2
        %v629 = vsel %vm605, %v627, %v628
        %630 = vrot.lane.b32.xlu0 %v608, 112
        %v631 = vpop.permute.xlu0 %630
        %632 = vrot.lane.b32.xlu0 %v607, 112
        %v633 = vpop.permute.xlu0 %632
        %634 = vrot.lane.b32.xlu0 %v611, 112
        %v635 = vpop.permute.xlu0 %634
        %636 = vrot.lane.b32.xlu0 %v610, 112
        %v637 = vpop.permute.xlu0 %636
        %638 = vrot.lane.b32.xlu0 %v614, 112
        %v639 = vpop.permute.xlu0 %638
        %640 = vrot.lane.b32.xlu0 %v613, 112
        %v641 = vpop.permute.xlu0 %640
        %642 = vrot.lane.b32.xlu0 %v617, 112
        %v643 = vpop.permute.xlu0 %642
        %644 = vrot.lane.b32.xlu0 %v616, 112
        %v645 = vpop.permute.xlu0 %644
        %646 = vrot.lane.b32.xlu0 %v620, 112
        %v647 = vpop.permute.xlu0 %646
        %648 = vrot.lane.b32.xlu0 %v619, 112
        %v649 = vpop.permute.xlu0 %648
        %650 = vrot.lane.b32.xlu0 %v623, 112
        %v651 = vpop.permute.xlu0 %650
        %652 = vrot.lane.b32.xlu0 %v622, 112
        %v653 = vpop.permute.xlu0 %652
        %654 = vrot.lane.b32.xlu0 %v626, 112
        %v655 = vpop.permute.xlu0 %654
        %656 = vrot.lane.b32.xlu0 %v625, 112
        %v657 = vpop.permute.xlu0 %656
        %658 = vrot.lane.b32.xlu0 %v629, 112
        %v659 = vpop.permute.xlu0 %658
        %660 = vrot.lane.b32.xlu0 %v628, 112
        %v661 = vpop.permute.xlu0 %660
        %v678 = vadd.f32 %v589, %v631
        %v679 = vadd.f32 %v590, %v633
        %v680 = vadd.f32 %v591, %v635
        %v681 = vadd.f32 %v592, %v637
        %v682 = vadd.f32 %v593, %v639
        %v683 = vadd.f32 %v594, %v641
        %v684 = vadd.f32 %v595, %v643
        %v685 = vadd.f32 %v596, %v645
        %v686 = vadd.f32 %v597, %v647
        %v687 = vadd.f32 %v598, %v649
        %v688 = vadd.f32 %v599, %v651
        %v689 = vadd.f32 %v600, %v653
        %v690 = vadd.f32 %v601, %v655
        %v691 = vadd.f32 %v602, %v657
        %v692 = vadd.f32 %v603, %v659
        %v693 = vadd.f32 %v604, %v661
        %vm694 = vcmask 64512
        %v695 = vsel %vm694, %v678, -inf
        %vm696 = vcmask 62464
        %v697 = vsel %vm696, %v679, -inf
        %v698 = vmax.f32 %v695, %v697
        %v699 = vrot.slane %v698, 4
        %v700 = vmax.f32 %v698, %v699
        %v701 = vrot.slane %v700, 2
        %v702 = vmax.f32 %v700, %v701
        %v703 = vrot.slane %v702, 1
        %v704 = vmax.f32 %v702, %v703
        %v705 = vsel %vm694, %v680, -inf
        %v706 = vsel %vm696, %v681, -inf
        %v707 = vmax.f32 %v705, %v706
        %v708 = vrot.slane %v707, 4
        %v709 = vmax.f32 %v707, %v708
        %v710 = vrot.slane %v709, 2
        %v711 = vmax.f32 %v709, %v710
        %v712 = vrot.slane %v711, 1
        %v713 = vmax.f32 %v711, %v712
        %v714 = vsel %vm694, %v682, -inf
        %v715 = vsel %vm696, %v683, -inf
        %v716 = vmax.f32 %v714, %v715
        %v717 = vrot.slane %v716, 4
        %v718 = vmax.f32 %v716, %v717
        %v719 = vrot.slane %v718, 2
        %v720 = vmax.f32 %v718, %v719
        %v721 = vrot.slane %v720, 1
        %v722 = vmax.f32 %v720, %v721
        %v723 = vsel %vm694, %v684, -inf
        %v724 = vsel %vm696, %v685, -inf
        %v725 = vmax.f32 %v723, %v724
        %v726 = vrot.slane %v725, 4
        %v727 = vmax.f32 %v725, %v726
        %v728 = vrot.slane %v727, 2
        %v729 = vmax.f32 %v727, %v728
        %v730 = vrot.slane %v729, 1
        %v731 = vmax.f32 %v729, %v730
        %v732 = vsel %vm694, %v686, -inf
        %v733 = vsel %vm696, %v687, -inf
        %v734 = vmax.f32 %v732, %v733
        %v735 = vrot.slane %v734, 4
        %v736 = vmax.f32 %v734, %v735
        %v737 = vrot.slane %v736, 2
        %v738 = vmax.f32 %v736, %v737
        %v739 = vrot.slane %v738, 1
        %v740 = vmax.f32 %v738, %v739
        %v741 = vsel %vm694, %v688, -inf
        %v742 = vsel %vm696, %v689, -inf
        %v743 = vmax.f32 %v741, %v742
        %v744 = vrot.slane %v743, 4
        %v745 = vmax.f32 %v743, %v744
        %v746 = vrot.slane %v745, 2
        %v747 = vmax.f32 %v745, %v746
        %v748 = vrot.slane %v747, 1
        %v749 = vmax.f32 %v747, %v748
        %v750 = vsel %vm694, %v690, -inf
        %v751 = vsel %vm696, %v691, -inf
        %v752 = vmax.f32 %v750, %v751
        %v753 = vrot.slane %v752, 4
        %v754 = vmax.f32 %v752, %v753
        %v755 = vrot.slane %v754, 2
        %v756 = vmax.f32 %v754, %v755
        %v757 = vrot.slane %v756, 1
        %v758 = vmax.f32 %v756, %v757
        %v759 = vsel %vm694, %v692, -inf
        %v760 = vsel %vm696, %v693, -inf
        %v761 = vmax.f32 %v759, %v760
        %v762 = vrot.slane %v761, 4
        %v763 = vmax.f32 %v761, %v762
        %v764 = vrot.slane %v763, 2
        %v765 = vmax.f32 %v763, %v764
        %v766 = vrot.slane %v765, 1
        %v767 = vmax.f32 %v765, %v766
        %vm768 = vcmask 1044480
        %v769 = vrot.slane %v438, 3
        %v770 = vrot.slane %v441, 3
        %v771 = vsel %vm768, %v769, %v770
        %v772 = vrot.slane %v446, 3
        %v773 = vrot.slane %v449, 3
        %v774 = vsel %vm768, %v772, %v773
        %v775 = vrot.slane %v454, 3
        %v776 = vrot.slane %v457, 3
        %v777 = vsel %vm768, %v775, %v776
        %v778 = vrot.slane %v462, 3
        %v779 = vrot.slane %v465, 3
        %v780 = vsel %vm768, %v778, %v779
        %v781 = vrot.slane %v470, 3
        %v782 = vrot.slane %v473, 3
        %v783 = vsel %vm768, %v781, %v782
        %v784 = vrot.slane %v478, 3
        %v785 = vrot.slane %v481, 3
        %v786 = vsel %vm768, %v784, %v785
        %v787 = vrot.slane %v486, 3
        %v788 = vrot.slane %v489, 3
        %v789 = vsel %vm768, %v787, %v788
        %v790 = vrot.slane %v494, 3
        %v791 = vrot.slane %v497, 3
        %v792 = vsel %vm768, %v790, %v791
        %793 = vrot.lane.b32.xlu0 %v771, 104
        %v794 = vpop.permute.xlu0 %793
        %795 = vrot.lane.b32.xlu0 %v770, 104
        %v796 = vpop.permute.xlu0 %795
        %797 = vrot.lane.b32.xlu0 %v774, 104
        %v798 = vpop.permute.xlu0 %797
        %799 = vrot.lane.b32.xlu0 %v773, 104
        %v800 = vpop.permute.xlu0 %799
        %801 = vrot.lane.b32.xlu0 %v777, 104
        %v802 = vpop.permute.xlu0 %801
        %803 = vrot.lane.b32.xlu0 %v776, 104
        %v804 = vpop.permute.xlu0 %803
        %805 = vrot.lane.b32.xlu0 %v780, 104
        %v806 = vpop.permute.xlu0 %805
        %807 = vrot.lane.b32.xlu0 %v779, 104
        %v808 = vpop.permute.xlu0 %807
        %809 = vrot.lane.b32.xlu0 %v783, 104
        %v810 = vpop.permute.xlu0 %809
        %811 = vrot.lane.b32.xlu0 %v782, 104
        %v812 = vpop.permute.xlu0 %811
        %813 = vrot.lane.b32.xlu0 %v786, 104
        %v814 = vpop.permute.xlu0 %813
        %815 = vrot.lane.b32.xlu0 %v785, 104
        %v816 = vpop.permute.xlu0 %815
        %817 = vrot.lane.b32.xlu0 %v789, 104
        %v818 = vpop.permute.xlu0 %817
        %819 = vrot.lane.b32.xlu0 %v788, 104
        %v820 = vpop.permute.xlu0 %819
        %821 = vrot.lane.b32.xlu0 %v792, 104
        %v822 = vpop.permute.xlu0 %821
        %823 = vrot.lane.b32.xlu0 %v791, 104
        %v824 = vpop.permute.xlu0 %823
        %v841 = vadd.f32 %v678, %v794
        %v842 = vadd.f32 %v679, %v796
        %v843 = vadd.f32 %v680, %v798
        %v844 = vadd.f32 %v681, %v800
        %v845 = vadd.f32 %v682, %v802
        %v846 = vadd.f32 %v683, %v804
        %v847 = vadd.f32 %v684, %v806
        %v848 = vadd.f32 %v685, %v808
        %v849 = vadd.f32 %v686, %v810
        %v850 = vadd.f32 %v687, %v812
        %v851 = vadd.f32 %v688, %v814
        %v852 = vadd.f32 %v689, %v816
        %v853 = vadd.f32 %v690, %v818
        %v854 = vadd.f32 %v691, %v820
        %v855 = vadd.f32 %v692, %v822
        %v856 = vadd.f32 %v693, %v824
        %vm857 = vcmask 261312
        %v858 = vsel %vm857, %v841, -inf
        %vm859 = vcmask 258240
        %v860 = vsel %vm859, %v842, -inf
        %v861 = vmax.f32 %v858, %v860
        %v862 = vrot.slane %v861, 4
        %v863 = vmax.f32 %v861, %v862
        %v864 = vrot.slane %v863, 2
        %v865 = vmax.f32 %v863, %v864
        %v866 = vrot.slane %v865, 1
        %v867 = vmax.f32 %v865, %v866
        %v868 = vsel %vm857, %v843, -inf
        %v869 = vsel %vm859, %v844, -inf
        %v870 = vmax.f32 %v868, %v869
        %v871 = vrot.slane %v870, 4
        %v872 = vmax.f32 %v870, %v871
        %v873 = vrot.slane %v872, 2
        %v874 = vmax.f32 %v872, %v873
        %v875 = vrot.slane %v874, 1
        %v876 = vmax.f32 %v874, %v875
        %v877 = vsel %vm857, %v845, -inf
        %v878 = vsel %vm859, %v846, -inf
        %v879 = vmax.f32 %v877, %v878
        %v880 = vrot.slane %v879, 4
        %v881 = vmax.f32 %v879, %v880
        %v882 = vrot.slane %v881, 2
        %v883 = vmax.f32 %v881, %v882
        %v884 = vrot.slane %v883, 1
        %v885 = vmax.f32 %v883, %v884
        %v886 = vsel %vm857, %v847, -inf
        %v887 = vsel %vm859, %v848, -inf
        %v888 = vmax.f32 %v886, %v887
        %v889 = vrot.slane %v888, 4
        %v890 = vmax.f32 %v888, %v889
        %v891 = vrot.slane %v890, 2
        %v892 = vmax.f32 %v890, %v891
        %v893 = vrot.slane %v892, 1
        %v894 = vmax.f32 %v892, %v893
        %v895 = vsel %vm857, %v849, -inf
        %v896 = vsel %vm859, %v850, -inf
        %v897 = vmax.f32 %v895, %v896
        %v898 = vrot.slane %v897, 4
        %v899 = vmax.f32 %v897, %v898
        %v900 = vrot.slane %v899, 2
        %v901 = vmax.f32 %v899, %v900
        %v902 = vrot.slane %v901, 1
        %v903 = vmax.f32 %v901, %v902
        %v904 = vsel %vm857, %v851, -inf
        %v905 = vsel %vm859, %v852, -inf
        %v906 = vmax.f32 %v904, %v905
        %v907 = vrot.slane %v906, 4
        %v908 = vmax.f32 %v906, %v907
        %v909 = vrot.slane %v908, 2
        %v910 = vmax.f32 %v908, %v909
        %v911 = vrot.slane %v910, 1
        %v912 = vmax.f32 %v910, %v911
        %v913 = vsel %vm857, %v853, -inf
        %v914 = vsel %vm859, %v854, -inf
        %v915 = vmax.f32 %v913, %v914
        %v916 = vrot.slane %v915, 4
        %v917 = vmax.f32 %v915, %v916
        %v918 = vrot.slane %v917, 2
        %v919 = vmax.f32 %v917, %v918
        %v920 = vrot.slane %v919, 1
        %v921 = vmax.f32 %v919, %v920
        %v922 = vsel %vm857, %v855, -inf
        %v923 = vsel %vm859, %v856, -inf
        %v924 = vmax.f32 %v922, %v923
        %v925 = vrot.slane %v924, 4
        %v926 = vmax.f32 %v924, %v925
        %v927 = vrot.slane %v926, 2
        %v928 = vmax.f32 %v926, %v927
        %v929 = vrot.slane %v928, 1
        %v930 = vmax.f32 %v928, %v929
        %vm931 = vcmask 1043456
        %v932 = vrot.slane %v438, 4
        %v933 = vrot.slane %v441, 4
        %v934 = vsel %vm931, %v932, %v933
        %v935 = vrot.slane %v446, 4
        %v936 = vrot.slane %v449, 4
        %v937 = vsel %vm931, %v935, %v936
        %v938 = vrot.slane %v454, 4
        %v939 = vrot.slane %v457, 4
        %v940 = vsel %vm931, %v938, %v939
        %v941 = vrot.slane %v462, 4
        %v942 = vrot.slane %v465, 4
        %v943 = vsel %vm931, %v941, %v942
        %v944 = vrot.slane %v470, 4
        %v945 = vrot.slane %v473, 4
        %v946 = vsel %vm931, %v944, %v945
        %v947 = vrot.slane %v478, 4
        %v948 = vrot.slane %v481, 4
        %v949 = vsel %vm931, %v947, %v948
        %v950 = vrot.slane %v486, 4
        %v951 = vrot.slane %v489, 4
        %v952 = vsel %vm931, %v950, %v951
        %v953 = vrot.slane %v494, 4
        %v954 = vrot.slane %v497, 4
        %v955 = vsel %vm931, %v953, %v954
        %956 = vrot.lane.b32.xlu0 %v934, 96
        %v957 = vpop.permute.xlu0 %956
        %958 = vrot.lane.b32.xlu0 %v933, 96
        %v959 = vpop.permute.xlu0 %958
        %960 = vrot.lane.b32.xlu0 %v937, 96
        %v961 = vpop.permute.xlu0 %960
        %962 = vrot.lane.b32.xlu0 %v936, 96
        %v963 = vpop.permute.xlu0 %962
        %964 = vrot.lane.b32.xlu0 %v940, 96
        %v965 = vpop.permute.xlu0 %964
        %966 = vrot.lane.b32.xlu0 %v939, 96
        %v967 = vpop.permute.xlu0 %966
        %968 = vrot.lane.b32.xlu0 %v943, 96
        %v969 = vpop.permute.xlu0 %968
        %970 = vrot.lane.b32.xlu0 %v942, 96
        %v971 = vpop.permute.xlu0 %970
        %972 = vrot.lane.b32.xlu0 %v946, 96
        %v973 = vpop.permute.xlu0 %972
        %974 = vrot.lane.b32.xlu0 %v945, 96
        %v975 = vpop.permute.xlu0 %974
        %976 = vrot.lane.b32.xlu0 %v949, 96
        %v977 = vpop.permute.xlu0 %976
        %978 = vrot.lane.b32.xlu0 %v948, 96
        %v979 = vpop.permute.xlu0 %978
        %980 = vrot.lane.b32.xlu0 %v952, 96
        %v981 = vpop.permute.xlu0 %980
        %982 = vrot.lane.b32.xlu0 %v951, 96
        %v983 = vpop.permute.xlu0 %982
        %984 = vrot.lane.b32.xlu0 %v955, 96
        %v985 = vpop.permute.xlu0 %984
        %986 = vrot.lane.b32.xlu0 %v954, 96
        %v987 = vpop.permute.xlu0 %986
        %v1004 = vadd.f32 %v841, %v957
        %v1005 = vadd.f32 %v842, %v959
        %v1006 = vadd.f32 %v843, %v961
        %v1007 = vadd.f32 %v844, %v963
        %v1008 = vadd.f32 %v845, %v965
        %v1009 = vadd.f32 %v846, %v967
        %v1010 = vadd.f32 %v847, %v969
        %v1011 = vadd.f32 %v848, %v971
        %v1012 = vadd.f32 %v849, %v973
        %v1013 = vadd.f32 %v850, %v975
        %v1014 = vadd.f32 %v851, %v977
        %v1015 = vadd.f32 %v852, %v979
        %v1016 = vadd.f32 %v853, %v981
        %v1017 = vadd.f32 %v854, %v983
        %v1018 = vadd.f32 %v855, %v985
        %v1019 = vadd.f32 %v856, %v987
        %vm1020 = vcmask 523712
        %v1021 = vsel %vm1020, %v1004, -inf
        %vm1022 = vcmask 519616
        %v1023 = vsel %vm1022, %v1005, -inf
        %v1024 = vmax.f32 %v1021, %v1023
        %v1025 = vrot.slane %v1024, 4
        %v1026 = vmax.f32 %v1024, %v1025
        %v1027 = vrot.slane %v1026, 2
        %v1028 = vmax.f32 %v1026, %v1027
        %v1029 = vrot.slane %v1028, 1
        %v1030 = vmax.f32 %v1028, %v1029
        %v1031 = vsel %vm1020, %v1006, -inf
        %v1032 = vsel %vm1022, %v1007, -inf
        %v1033 = vmax.f32 %v1031, %v1032
        %v1034 = vrot.slane %v1033, 4
        %v1035 = vmax.f32 %v1033, %v1034
        %v1036 = vrot.slane %v1035, 2
        %v1037 = vmax.f32 %v1035, %v1036
        %v1038 = vrot.slane %v1037, 1
        %v1039 = vmax.f32 %v1037, %v1038
        %v1040 = vsel %vm1020, %v1008, -inf
        %v1041 = vsel %vm1022, %v1009, -inf
        %v1042 = vmax.f32 %v1040, %v1041
        %v1043 = vrot.slane %v1042, 4
        %v1044 = vmax.f32 %v1042, %v1043
        %v1045 = vrot.slane %v1044, 2
        %v1046 = vmax.f32 %v1044, %v1045
        %v1047 = vrot.slane %v1046, 1
        %v1048 = vmax.f32 %v1046, %v1047
        %v1049 = vsel %vm1020, %v1010, -inf
        %v1050 = vsel %vm1022, %v1011, -inf
        %v1051 = vmax.f32 %v1049, %v1050
        %v1052 = vrot.slane %v1051, 4
        %v1053 = vmax.f32 %v1051, %v1052
        %v1054 = vrot.slane %v1053, 2
        %v1055 = vmax.f32 %v1053, %v1054
        %v1056 = vrot.slane %v1055, 1
        %v1057 = vmax.f32 %v1055, %v1056
        %v1058 = vsel %vm1020, %v1012, -inf
        %v1059 = vsel %vm1022, %v1013, -inf
        %v1060 = vmax.f32 %v1058, %v1059
        %v1061 = vrot.slane %v1060, 4
        %v1062 = vmax.f32 %v1060, %v1061
        %v1063 = vrot.slane %v1062, 2
        %v1064 = vmax.f32 %v1062, %v1063
        %v1065 = vrot.slane %v1064, 1
        %v1066 = vmax.f32 %v1064, %v1065
        %v1067 = vsel %vm1020, %v1014, -inf
        %v1068 = vsel %vm1022, %v1015, -inf
        %v1069 = vmax.f32 %v1067, %v1068
        %v1070 = vrot.slane %v1069, 4
        %v1071 = vmax.f32 %v1069, %v1070
        %v1072 = vrot.slane %v1071, 2
        %v1073 = vmax.f32 %v1071, %v1072
        %v1074 = vrot.slane %v1073, 1
        %v1075 = vmax.f32 %v1073, %v1074
        %v1076 = vsel %vm1020, %v1016, -inf
        %v1077 = vsel %vm1022, %v1017, -inf
        %v1078 = vmax.f32 %v1076, %v1077
        %v1079 = vrot.slane %v1078, 4
        %v1080 = vmax.f32 %v1078, %v1079
        %v1081 = vrot.slane %v1080, 2
        %v1082 = vmax.f32 %v1080, %v1081
        %v1083 = vrot.slane %v1082, 1
        %v1084 = vmax.f32 %v1082, %v1083
        %v1085 = vsel %vm1020, %v1018, -inf
        %v1086 = vsel %vm1022, %v1019, -inf
        %v1087 = vmax.f32 %v1085, %v1086
        %v1088 = vrot.slane %v1087, 4
        %v1089 = vmax.f32 %v1087, %v1088
        %v1090 = vrot.slane %v1089, 2
        %v1091 = vmax.f32 %v1089, %v1090
        %v1092 = vrot.slane %v1091, 1
        %v1093 = vmax.f32 %v1091, %v1092
        %vm1102 = vcmask 1041409
        %v1103 = vsel %vm1102, %v713, %v704
        %vm1104 = vcmask 1042434
        %v1105 = vsel %vm1104, %v722, %v1103
        %vm1106 = vcmask 1043459
        %v1107 = vsel %vm1106, %v731, %v1105
        %vm1108 = vcmask 1044484
        %v1109 = vsel %vm1108, %v740, %v1107
        %vm1110 = vcmask 1045509
        %v1111 = vsel %vm1110, %v749, %v1109
        %vm1112 = vcmask 1046534
        %v1113 = vsel %vm1112, %v758, %v1111
        %vm1114 = vcmask 1047559
        %v1115 = vsel %vm1114, %v767, %v1113
        %v1125 = vsel %vm1102, %v876, %v867
        %v1126 = vsel %vm1104, %v885, %v1125
        %v1127 = vsel %vm1106, %v894, %v1126
        %v1128 = vsel %vm1108, %v903, %v1127
        %v1129 = vsel %vm1110, %v912, %v1128
        %v1130 = vsel %vm1112, %v921, %v1129
        %v1131 = vsel %vm1114, %v930, %v1130
        %1132 = vrot.lane.b32.xlu0 %v1131, 112
        %v1133 = vpop.permute.xlu0 %1132
        %v1143 = vsel %vm1102, %v1039, %v1030
        %v1144 = vsel %vm1104, %v1048, %v1143
        %v1145 = vsel %vm1106, %v1057, %v1144
        %v1146 = vsel %vm1108, %v1066, %v1145
        %v1147 = vsel %vm1110, %v1075, %v1146
        %v1148 = vsel %vm1112, %v1084, %v1147
        %v1149 = vsel %vm1114, %v1093, %v1148
        %1150 = vrot.lane.b32.xlu0 %v1149, 88
        %v1151 = vpop.permute.xlu0 %1150
        %v1153 = vsel %vm694, %v1115, %v1133
        %vm1154 = vcmask 130048
        %v1155 = vsel %vm1154, %v1153, %v1151
        %v1156 = vld [vmem:[%s2] sm:$0x1]
        %v1158 = vlaneseq
        %v1159 = vshrl.u32 %v1158, 7
        %v1160 = vsub.s32 0, %v1159
        %v1161 = vrot.slane %v1156, %v1160
        %v1163 = vadd.f32 %v1155, %v1161
        %v1164 = vmax.f32 %v1163, 0.0
        %vm1165 = vcmask 195584
        %v1166 = vsel %vm1165, %v1164, 0.0
        %v1167 = vpack.c.bf16 %v1166, %v1166
        %v1168 = vld [vmem:[#allocation7] sm:$0xf]
        %v1169 = vld [vmem:[#allocation7 + $0x4] sm:$0xf]
        %v1170 = vld [vmem:[#allocation7 + $0x8] sm:$0xf]
        %v1171 = vld [vmem:[#allocation7 + $0xc] sm:$0xf]
        %v1172 = vld [vmem:[#allocation7 + $0x10] sm:$0xf]
        %v1173 = vld [vmem:[#allocation7 + $0x14] sm:$0xf]
        %v1174 = vld [vmem:[#allocation7 + $0x18] sm:$0xf]
        %v1175 = vld [vmem:[#allocation7 + $0x1c] sm:$0xf]
        %v1176 = vld [vmem:[#allocation7 + $0x20] sm:$0xf]
        %v1177 = vld [vmem:[#allocation7 + $0x24] sm:$0xf]
        %v1178 = vld [vmem:[#allocation7 + $0x28] sm:$0xf]
        %v1179 = vld [vmem:[#allocation7 + $0x2c] sm:$0xf]
        %v1180 = vld [vmem:[#allocation7 + $0x30] sm:$0xf]
        %v1181 = vld [vmem:[#allocation7 + $0x34] sm:$0xf]
        %v1182 = vld [vmem:[#allocation7 + $0x38] sm:$0xf]
        %v1183 = vld [vmem:[#allocation7 + $0x3c] sm:$0xf]
        %v1184 = vld [vmem:[%s4] sm:$0x1]
        %v1186 = vlaneseq
        %v1187 = vshrl.u32 %v1186, 7
        %v1188 = vsub.s32 0, %v1187
        %v1189 = vrot.slane %v1184, %v1188
        %v1207 = vunpack.c.l.b16 %v1168
        %v1208 = vunpack.c.l.b16 %v1169
        %v1209 = vunpack.c.l.b16 %v1170
        %v1210 = vunpack.c.l.b16 %v1171
        %v1211 = vunpack.c.l.b16 %v1172
        %v1212 = vunpack.c.l.b16 %v1173
        %v1213 = vunpack.c.l.b16 %v1174
        %v1214 = vunpack.c.l.b16 %v1175
        %v1215 = vunpack.c.l.b16 %v1176
        %v1216 = vunpack.c.l.b16 %v1177
        %v1217 = vunpack.c.l.b16 %v1178
        %v1218 = vunpack.c.l.b16 %v1179
        %v1219 = vunpack.c.l.b16 %v1180
        %v1220 = vunpack.c.l.b16 %v1181
        %v1221 = vunpack.c.l.b16 %v1182
        %v1222 = vunpack.c.l.b16 %v1183
        %v1223 = vpack.c.b16 %v1208, %v1207
        %v1224 = vpack.c.b16 %v1210, %v1209
        %v1225 = vpack.c.b16 %v1212, %v1211
        %v1226 = vpack.c.b16 %v1214, %v1213
        %v1227 = vpack.c.b16 %v1216, %v1215
        %v1228 = vpack.c.b16 %v1218, %v1217
        %v1229 = vpack.c.b16 %v1220, %v1219
        %v1230 = vpack.c.b16 %v1222, %v1221
        %1239 = vmatprep.subr.bf16.mxu0 0
        %1240 = vmatpush1.bf16.msra.mxu0 %v1223
        %1241 = vmatprep.subr.bf16.mxu0 0
        %1242 = vmatpush1.bf16.msra.mxu0 %v1224
        %1243 = vmatprep.subr.bf16.mxu0 0
        %1244 = vmatpush1.bf16.msra.mxu0 %v1225
        %1245 = vmatprep.subr.bf16.mxu0 0
        %1246 = vmatpush1.bf16.msra.mxu0 %v1226
        %1247 = vmatprep.subr.bf16.mxu0 0
        %1248 = vmatpush1.bf16.msra.mxu0 %v1227
        %1249 = vmatprep.subr.bf16.mxu0 0
        %1250 = vmatpush1.bf16.msra.mxu0 %v1228
        %1251 = vmatprep.subr.bf16.mxu0 0
        %1252 = vmatpush1.bf16.msra.mxu0 %v1229
        %1253 = vmatprep.subr.bf16.mxu0 0
        %1254 = vmatpush1.bf16.msra.mxu0 %v1230
        %1255 = vmatprep.subr.bf16.mxu0 0
        %1256 = vmatpush1.bf16.msra.mxu0 0
        %1257 = vmatprep.subr.bf16.mxu0 0
        %1258 = vmatpush1.bf16.msra.mxu0 0
        %1259 = vmatprep.subr.bf16.mxu0 0
        %1260 = vmatpush1.bf16.msra.mxu0 0
        %1261 = vmatprep.subr.bf16.mxu0 0
        %1262 = vmatpush1.bf16.msra.mxu0 0
        %1263 = vmatprep.subr.bf16.mxu0 0
        %1264 = vmatpush1.bf16.msra.mxu0 0
        %1265 = vmatprep.subr.bf16.mxu0 0
        %1266 = vmatpush1.bf16.msra.mxu0 0
        %1267 = vmatprep.subr.bf16.mxu0 0
        %1268 = vmatpush1.bf16.msra.mxu0 0
        %1269 = vmatprep.subr.bf16.mxu0 0
        %1270 = vmatpush1.bf16.msra.mxu0 0
        %1271 = vmatprep.mubr.bf16.mxu0 0
        %1272 = vmatmul.mubr.bf16.gmra.mrb[0].mxu0 %v1167
        %v1273 = vpop.f32.mrb[0].mxu0
        %v1274 = vadd.f32 %v1189, %v1273
        %v1275 = vpop.f32.mrb[0].mxu0
        %v1276 = vpop.f32.mrb[0].mxu0
        %v1277 = vpop.f32.mrb[0].mxu0
        %1278 = vdwg.mxu0
        %1279 = vst [vmem:[%s272] sm:$0xff] %v1274
        %s1280 = sand.u32 %s141, 1
        %s1281 = scalar_lea.sflag [#allocation4], %s1280
        %s1282 = sand.u32 %s141, 1
        %s1283 = smul.addr %s1282, 8
        %s1284 = scalar_lea.vmem [#allocation8], %s1283
        // Predicated region
        $region53: #{tpu_custom_call.1} parent=39 // pred_check
          %p1285 = pneg %p151
        $region54: #{tpu_custom_call.1} parent=39 // pred_check_branch
          %1287 = sbr.rel (%p1285) target = $region56
        $region55: #{tpu_custom_call.1} parent=39 // pred_region
          %s1289 = ssub.s32 128, 128
          %1290 = vsyncadd %s1281, %s1289
          %s1291 = smul.addr %s23, 128
          %s1292 = scalar_lea.hbm %s5, %s1291
          %s1294 = sshll.u32 %s1284, 4
          %s1295 = int_to_ptr.vmem [resolvable:$true] %s1294
          %1297 = dma.vmem_to_hbm [thread:$0]  %s1295, 128, %s1292, %s1281
        $region56: #{tpu_custom_call.1} parent=39 // pred_fallthru
          _
      $region40: #{tpu_custom_call.1} parent=5 // pred_fallthru
        _
      %p1298 = scmp.le.s32.totalorder 2, %s18
      // Predicated region
      $region57: #{tpu_custom_call.1} parent=5 // pred_check
        %p1299 = pneg %p1298
      $region58: #{tpu_custom_call.1} parent=5 // pred_check_branch
        %1301 = sbr.rel (%p1299) target = $region60
      $region59: #{tpu_custom_call.1} parent=5 // pred_region
        %s1302 = ssub.s32 %s18, 2
        // Predicated region
        $region61: #{tpu_custom_call.1} parent=59 // pred_check
          %p1303 = pneg %p157
        $region62: #{tpu_custom_call.1} parent=59 // pred_check_branch
          %1305 = sbr.rel (%p1303) target = $region64
        $region63: #{tpu_custom_call.1} parent=59 // pred_region
          %s1306 = sand.u32 %s142, 1
          %s1307 = scalar_lea.sflag [#allocation4], %s1306
          %s1308 = sand.u32 %s142, 1
          %s1309 = smul.addr %s1308, 8
          %s1310 = scalar_lea.vmem [#allocation8], %s1309
          %1311 = dma.done %s1307, 128
        $region64: #{tpu_custom_call.1} parent=59 // pred_fallthru
          _
      $region60: #{tpu_custom_call.1} parent=5 // pred_fallthru
        _
    $region6: #{tpu_custom_call.1} parent=1 // loop_footer
      %s22 = sadd.s32 1, %s18
    $region7: #{tpu_custom_call.1} parent=1 // loop_footer_branch
      %17 = sbr.rel target = $region3
    $region8: #{tpu_custom_call.1} parent=1 // loop_exit
      _
    %1312 = vsyncpa [#allocation3], 1
    %s1313 = scalar_lea.sflag [#allocation3], 1
    %1314 = vsyncpa %s1313, 1
    %1315 = vsyncpa [#allocation6], 1
    %1316 = vsyncpa [#allocation4], 1
    %s1317 = scalar_lea.sflag [#allocation4], 1
    %1318 = vsyncpa %s1317, 1

</llo_original>
